<compile_context>
chip_gen: v7x
topology: tpu7x:2x2x1
jax: 0.10.0
libtpu: 0.0.40
codegen_flags: <defaults>
</compile_context>

<pallas_src>
import functools

import jax
import jax.numpy as jnp
from jax.experimental import pallas as pl
from jax.experimental.pallas import tpu as pltpu

LANE = 128
SMALL_BYPASS_BYTES = 1 * 1024 * 1024  # below this, plain XLA fusion wins


def _sublane_for(dtype) -> int:
    itemsize = jnp.dtype(dtype).itemsize
    return {4: 8, 2: 16, 1: 32}.get(itemsize, 8)


@functools.lru_cache(maxsize=1)
def _chip_params():
    """Return (target_block_bytes, vmem_limit_bytes, num_tensorcores)."""
    try:
        vmem_bytes = int(pltpu.get_tpu_info().vmem_capacity_bytes)
    except Exception:
        vmem_bytes = 128 * 1024 * 1024  # conservative v5e/v6e fallback
    if vmem_bytes <= 96 * 1024 * 1024:
        # v7x-class: 64 MiB VMEM/TC, ~3.2 TB/s HBM, 2 TensorCores per chip.
        # 2 bufs x (in + out) x 8 MiB = 32 MiB of buffers -> 48 MiB budget.
        return 8 * 1024 * 1024, 48 * 1024 * 1024, 2
    # v5e/v6e-class: 128 MiB VMEM, 1 TensorCore per chip.
    # 2 bufs x (in + out) x 4 MiB = 16 MiB -> 32 MiB budget (raises v5e's 16).
    return 4 * 1024 * 1024, 32 * 1024 * 1024, 1


def _lrelu_kernel(x_ref, o_ref):
    x = x_ref[...]
    o_ref[...] = jnp.maximum(x * jnp.asarray(0.2, x.dtype), x)


def _lrelu_2d(x2d: jax.Array, *, donate_input: bool = False) -> jax.Array:
    """Stream a lane-dense (rows, 128) slab through the Pallas kernel."""
    rows, _ = x2d.shape
    dtype = x2d.dtype
    itemsize = jnp.dtype(dtype).itemsize
    sublane = _sublane_for(dtype)
    target_block_bytes, vmem_limit, num_tc = _chip_params()

    # Largest block that fits the per-buffer budget ...
    max_block_rows = max(sublane, target_block_bytes // (LANE * itemsize))
    # ... but keep >= 2 blocks per TensorCore so the double-buffered DMA
    # overlaps compute and (on v7x) the "parallel" axis has work for both TCs.
    min_blocks = 2 * num_tc
    cap_rows = max(sublane, (pl.cdiv(rows, min_blocks) // sublane) * sublane)
    block_rows = min(rows, max_block_rows, cap_rows)
    if block_rows < rows:
        # Partial blocks must stay (sublane, 128)-aligned; Pallas masks the
        # ragged final grid step via cdiv below.
        block_rows = max(sublane, (block_rows // sublane) * sublane)

    grid = (pl.cdiv(rows, block_rows),)
    n = rows * LANE

    # TODO(synk): confirm on an xprof trace that the "parallel" axis is sharded
    # across both v7x TensorCores; otherwise add an explicit CORE_PARALLEL
    # leading grid axis of size 2.
    return pl.pallas_call(
        _lrelu_kernel,
        out_shape=jax.ShapeDtypeStruct((rows, LANE), dtype),
        grid_spec=pltpu.PrefetchScalarGridSpec(
            num_scalar_prefetch=0,
            grid=grid,
            in_specs=[pl.BlockSpec((block_rows, LANE), lambda i: (i, 0))],
            out_specs=pl.BlockSpec((block_rows, LANE), lambda i: (i, 0)),
        ),
        compiler_params=pltpu.CompilerParams(
            dimension_semantics=("parallel",),
            vmem_limit_bytes=vmem_limit,
        ),
        cost_estimate=pl.CostEstimate(
            flops=2 * n,
            bytes_accessed=2 * n * itemsize,
            transcendentals=0,
        ),
        input_output_aliases=({0: 0} if donate_input else {}),
    )(x2d)


def lrelu(x: jax.Array, *, donate_input: bool = False) -> jax.Array:
    """Elementwise max(0.2*x, x) (LeakyReLU(0.2) forward), Pallas TPU kernel.

    Set donate_input=True only when the caller no longer needs `x`; it lets
    XLA reuse the input HBM buffer for the output.
    """
    if not jnp.issubdtype(x.dtype, jnp.floating):
        # Matches PyTorch: leaky_relu is only defined for floating dtypes.
        raise TypeError("lrelu only supports floating-point dtypes")

    orig_shape = x.shape
    n = x.size
    itemsize = jnp.dtype(x.dtype).itemsize
    if n == 0:
        return x

    # Tiny tensors: fixed pallas_call overhead dominates and a custom call
    # blocks XLA from fusing this elementwise op into neighbors.
    if n * itemsize < SMALL_BYPASS_BYTES:
        return jnp.maximum(x * jnp.asarray(0.2, x.dtype), x)

    if n % LANE == 0:
        # Fast path: contiguous reshape only, no extra HBM traffic.
        out2d = _lrelu_2d(x.reshape(n // LANE, LANE), donate_input=donate_input)
        return out2d.reshape(orig_shape)

    # Ragged tail (< 128 elements): kernel handles the lane-aligned prefix,
    # the tail runs as plain jnp — no full-tensor jnp.pad or output slice.
    n_main = (n // LANE) * LANE
    flat = x.reshape(-1)
    main = _lrelu_2d(flat[:n_main].reshape(n_main // LANE, LANE)).reshape(-1)
    tail = flat[n_main:]
    tail = jnp.maximum(tail * jnp.asarray(0.2, tail.dtype), tail)
    return jnp.concatenate([main, tail]).reshape(orig_shape)


if __name__ == "__main__":
    key = jax.random.PRNGKey(0)

    def ref(a):
        return jnp.maximum(a * 0.2, a)

    # Primary: small NCHW UNet-style activation (takes the fused bypass path).
    x = jax.random.normal(key, (2, 4, 16, 16), dtype=jnp.float32)
    y = lrelu(x)
    jax.block_until_ready(y)
    assert y.shape == x.shape and y.dtype == x.dtype
    assert jnp.allclose(y, ref(x), atol=0.0, rtol=0.0), "mismatch (small)"

    k1, k2 = jax.random.split(key)

    # Larger aligned activation: exercises the Pallas streaming kernel.
    xl = jax.random.normal(k1, (2, 32, 64, 64), dtype=jnp.float32)  # 1 MiB
    yl = lrelu(xl)
    jax.block_until_ready(yl)
    assert jnp.allclose(yl, ref(xl), atol=0.0, rtol=0.0), "mismatch (aligned)"

    # Ragged numel (not a multiple of 128) above the bypass threshold:
    # exercises the aligned-prefix kernel + VPU tail path.
    xr = jax.random.normal(k2, (3, 331, 337), dtype=jnp.float32)
    yr = lrelu(xr)
    jax.block_until_ready(yr)
    assert yr.shape == xr.shape and yr.dtype == xr.dtype
    assert jnp.allclose(yr, ref(xr), atol=0.0, rtol=0.0), "mismatch (ragged)"

    print("KERNEL_OK")
</pallas_src>

<mosaic_0001>
module attributes {stable_mosaic.version = 11 : i64} {
  func.func @_lrelu_kernel(%arg0: i32, %arg1: memref<1024x128xf32, #tpu.memory_space<vmem>>, %arg2: memref<1024x128xf32, #tpu.memory_space<vmem>>) attributes {dimension_semantics = [#tpu.dimension_semantics<parallel>], iteration_bounds = array<i64: 2>, scalar_prefetch = 0 : i64, scratch_operands = 0 : i64, tpu.core_type = #tpu.core_type<tc>, window_params = [{transform_indices = @transform_0, window_bounds = array<i64: 1024, 128>}, {transform_indices = @transform_1, window_bounds = array<i64: 1024, 128>}]} {
    %c0 = arith.constant 0 : index
    %c0_0 = arith.constant 0 : index
    %0 = vector.load %arg1[%c0, %c0_0] : memref<1024x128xf32, #tpu.memory_space<vmem>>, vector<1024x128xf32>
    %cst = arith.constant 2.000000e-01 : f32
    %1 = vector.broadcast %cst : f32 to vector<1024x128xf32>
    %2 = arith.mulf %0, %1 : vector<1024x128xf32>
    %3 = arith.maximumf %2, %0 : vector<1024x128xf32>
    %c0_1 = arith.constant 0 : index
    %c0_2 = arith.constant 0 : index
    %4 = vector.load %arg2[%c0_1, %c0_2] : memref<1024x128xf32, #tpu.memory_space<vmem>>, vector<1024x128xf32>
    tpu.vector_store %arg2[%c0_1, %c0_2], %3 {strides = array<i32>} : memref<1024x128xf32, #tpu.memory_space<vmem>>, vector<1024x128xf32>,
    return
  }
  func.func @transform_0(%arg0: i32) -> (i32, i32) {
    %c0_i32 = arith.constant 0 : i32
    %c0_i32_0 = arith.constant 0 : i32
    return %arg0, %c0_i32 : i32, i32
  }
  func.func @transform_1(%arg0: i32) -> (i32, i32) {
    %c0_i32 = arith.constant 0 : i32
    %c0_i32_0 = arith.constant 0 : i32
    return %arg0, %c0_i32 : i32, i32
  }
}

</mosaic_0001>

<llo_original>
// kernel: tpu_custom_call.1
$region0: #{tpu_custom_call.1}
  #allocation0 [shape = 'u32[]', space=smem, size = 0x4, offset = 0x4, fixed_abs, tag = 'smem constant byte address 0x4 - core index']
  #allocation1 [shape = 'u32[144,128]{1,0:T(1,128)}', space=vmem, size = 0x12000, scoped, tag = 'internal scratch']
  %s0 = inlined_call_operand.hbm [shape: f32[2048,128], index: 0, kind: input, shape index: {}]
  %s1 = inlined_call_operand.hbm [shape: f32[2048,128], index: 1, kind: output, shape index: {}]
  %s2 = sld [smem:[#allocation0]]
  $region41: #{tpu_custom_call.1} parent=0
    _
  %s4 = ssub.s32 1, %s2
  %s5 = scalar_select 0, %s4, %s2
  $region1: #{tpu_custom_call.1} parent=0
    #allocation2 [shape = 'u8[1048576]{0}', space=vmem, size = 0x100000, scoped, tag = 'input window, operand 0']
    #allocation3 [shape = 's32[2]{0}', space=sflag, size = 0x8, scoped, tag = 'scoped memory for tpu_custom_call.1']
    #allocation4 [shape = 's32[2]{0}', space=sflag, size = 0x8, scoped, tag = 'scoped memory for tpu_custom_call.1']
    #allocation5 [shape = 'u8[1048576]{0}', space=vmem, size = 0x100000, scoped, tag = 'output window, operand 0']
    %6 = vsyncpa [#allocation3], 0
    %s7 = scalar_lea.sflag [#allocation3], 1
    %8 = vsyncpa %s7, 0
    %9 = vsyncpa [#allocation4], 0
    %s10 = scalar_lea.sflag [#allocation4], 1
    %11 = vsyncpa %s10, 0
    loop: start=0, step=1, limit=4
    $region2: #{tpu_custom_call.1} parent=1 // loop_pre_header
      _
    $region3: #{tpu_custom_call.1} parent=1 // loop_header
      %s13 = sphi 0, %s17
      %p14 = scmp.ge.s32.totalorder %s13, 4
      %s23 = sphi 0, %s25
      %s26 = sphi 0, %s23
      %s27 = sphi 0, %s26
      %s43 = sphi 0, %s27
      %s49 = sphi 0, %s51
      %s52 = sphi 0, %s49
      %s53 = sphi 0, %s52
      %s69 = sphi 0, %s53
    $region4: #{tpu_custom_call.1} parent=1 // loop_header_branch
      %16 = sbr.rel (%p14) target = $region8
    $region5: #{tpu_custom_call.1} parent=1 // loop_body
      %s18 = ssub.s32 %s13, 1
      %s19 = ssub.s32 %s13, 2
      %s20 = sadd.s32 %s13, 1
      %s21 = ssub.s32 %s13, %s20
      %p22 = scmp.eq.s32.totalorder %s21, 0
      %s24 = sadd.s32 %s23, 1
      %s25 = scalar_select %p22, %s23, %s24
      %p28 = pneg %p22
      %p29 = scmp.eq.s32.totalorder %s13, 1
      %p30 = por %p28, %p29
      %p31 = scmp.ne.s32.totalorder %s23, %s26
      %p32 = scmp.eq.s32.totalorder %s13, 0
      %p33 = por %p31, %p32
      %p34 = scmp.ne.s32.totalorder %s23, %s26
      %p35 = scmp.eq.s32.totalorder %s18, 1
      %p36 = por %p34, %p35
      %p37 = scmp.ne.s32.totalorder %s26, %s27
      %p38 = scmp.eq.s32.totalorder %s18, 0
      %p39 = por %p37, %p38
      %p40 = scmp.ne.s32.totalorder %s26, %s27
      %p41 = scmp.eq.s32.totalorder %s19, 1
      %p42 = por %p40, %p41
      %p44 = scmp.ne.s32.totalorder %s27, %s43
      %p45 = scmp.eq.s32.totalorder %s19, 0
      %p46 = por %p44, %p45
      %s47 = ssub.s32 %s13, %s20
      %p48 = scmp.eq.s32.totalorder %s47, 0
      %s50 = sadd.s32 %s49, 1
      %s51 = scalar_select %p48, %s49, %s50
      %p54 = pneg %p48
      %p55 = scmp.eq.s32.totalorder %s13, 1
      %p56 = por %p54, %p55
      %p57 = scmp.ne.s32.totalorder %s49, %s52
      %p58 = scmp.eq.s32.totalorder %s13, 0
      %p59 = por %p57, %p58
      %p60 = scmp.ne.s32.totalorder %s49, %s52
      %p61 = scmp.eq.s32.totalorder %s18, 1
      %p62 = por %p60, %p61
      %p63 = scmp.ne.s32.totalorder %s52, %s53
      %p64 = scmp.eq.s32.totalorder %s18, 0
      %p65 = por %p63, %p64
      %p66 = scmp.ne.s32.totalorder %s52, %s53
      %p67 = scmp.eq.s32.totalorder %s19, 1
      %p68 = por %p66, %p67
      %p70 = scmp.ne.s32.totalorder %s53, %s69
      %p71 = scmp.eq.s32.totalorder %s19, 0
      %p72 = por %p70, %p71
      %p73 = scmp.le.s32.totalorder 1, %s13
      %p74 = scmp.lt.s32.totalorder %s13, 3
      %p75 = pnand %p73, %p74
      %p76 = pneg %p75
      // Predicated region
      $region9: #{tpu_custom_call.1} parent=5 // pred_check
        _
      $region10: #{tpu_custom_call.1} parent=5 // pred_check_branch
        %78 = sbr.rel (%p75) target = $region12
      $region11: #{tpu_custom_call.1} parent=5 // pred_region
        %s79 = ssub.s32 %s13, 1
      $region12: #{tpu_custom_call.1} parent=5 // pred_fallthru
        _
      %p80 = scmp.lt.s32.totalorder %s13, 2
      // Predicated region
      $region13: #{tpu_custom_call.1} parent=5 // pred_check
        %p81 = pneg %p80
      $region14: #{tpu_custom_call.1} parent=5 // pred_check_branch
        %83 = sbr.rel (%p81) target = $region16
      $region15: #{tpu_custom_call.1} parent=5 // pred_region
        // Predicated region
        $region17: #{tpu_custom_call.1} parent=15 // pred_check
          %p84 = pneg %p33
        $region18: #{tpu_custom_call.1} parent=15 // pred_check_branch
          %86 = sbr.rel (%p84) target = $region20
        $region19: #{tpu_custom_call.1} parent=15 // pred_region
          %s87 = sand.u32 %s23, 1
          %s88 = scalar_lea.sflag [#allocation3], %s87
          %s89 = sand.u32 %s23, 1
          %s90 = smul.addr %s89, 1024
          %s91 = scalar_lea.vmem [#allocation2], %s90
          %s92 = smul.u32 128, %s13
          %s94 = ssub.s32 16384, 16384
          %95 = vsyncadd %s88, %s94
          %s96 = smul.addr %s92, 128
          %s97 = scalar_lea.hbm %s0, %s96
          %s98 = sshll.u32 %s91, 4
          %s99 = int_to_ptr.vmem [resolvable:$true] %s98
          %104 = dma.hbm_to_vmem [thread:$0]  %s97, 16384, %s99, %s88, 128, 128, 8
        $region20: #{tpu_custom_call.1} parent=15 // pred_fallthru
          _
      $region16: #{tpu_custom_call.1} parent=5 // pred_fallthru
        _
      %p105 = scmp.le.s32.totalorder 1, %s13
      %p106 = scmp.lt.s32.totalorder %s13, 3
      %p107 = pnand %p105, %p106
      %p108 = pneg %p107
      // Predicated region
      $region21: #{tpu_custom_call.1} parent=5 // pred_check
        _
      $region22: #{tpu_custom_call.1} parent=5 // pred_check_branch
        %110 = sbr.rel (%p107) target = $region24
      $region23: #{tpu_custom_call.1} parent=5 // pred_region
        %s111 = ssub.s32 %s13, 1
        %s112 = sand.u32 %s26, 1
        %s113 = scalar_lea.sflag [#allocation3], %s112
        %s114 = sand.u32 %s26, 1
        %s115 = smul.addr %s114, 1024
        %s116 = scalar_lea.vmem [#allocation2], %s115
        // Predicated region
        $region25: #{tpu_custom_call.1} parent=23 // pred_check
          %p117 = pneg %p39
        $region26: #{tpu_custom_call.1} parent=23 // pred_check_branch
          %119 = sbr.rel (%p117) target = $region28
        $region27: #{tpu_custom_call.1} parent=23 // pred_region
          %120 = dma.done %s113, 16384
        $region28: #{tpu_custom_call.1} parent=23 // pred_fallthru
          _
        %s121 = sand.u32 %s26, 1
        %s122 = scalar_lea.sflag [#allocation3], %s121
        %s123 = sand.u32 %s26, 1
        %s124 = smul.addr %s123, 1024
        %s125 = scalar_lea.vmem [#allocation2], %s124
        %p126 = pneg %p39
        %p127 = pneg %p36
        %p128 = pneg %p65
        %p129 = pneg %p62
        %s130 = sand.u32 %s52, 1
        %s131 = scalar_lea.sflag [#allocation4], %s130
        %s132 = sand.u32 %s52, 1
        %s133 = smul.addr %s132, 1024
        %s134 = scalar_lea.vmem [#allocation5], %s133
        %s135 = smul.u32 128, %s18
        %s136 = smul.u32 128, %s18
        %v137 = vld [vmem:[%s116] sm:$0xff]
        %v138 = vld [vmem:[%s116 + $0x8] sm:$0xff]
        %v139 = vld [vmem:[%s116 + $0x10] sm:$0xff]
        %v140 = vld [vmem:[%s116 + $0x18] sm:$0xff]
        %v141 = vld [vmem:[%s116 + $0x20] sm:$0xff]
        %v142 = vld [vmem:[%s116 + $0x28] sm:$0xff]
        %v143 = vld [vmem:[%s116 + $0x30] sm:$0xff]
        %v144 = vld [vmem:[%s116 + $0x38] sm:$0xff]
        %v145 = vld [vmem:[%s116 + $0x40] sm:$0xff]
        %v146 = vld [vmem:[%s116 + $0x48] sm:$0xff]
        %v147 = vld [vmem:[%s116 + $0x50] sm:$0xff]
        %v148 = vld [vmem:[%s116 + $0x58] sm:$0xff]
        %v149 = vld [vmem:[%s116 + $0x60] sm:$0xff]
        %v150 = vld [vmem:[%s116 + $0x68] sm:$0xff]
        %v151 = vld [vmem:[%s116 + $0x70] sm:$0xff]
        %v152 = vld [vmem:[%s116 + $0x78] sm:$0xff]
        %v153 = vld [vmem:[%s116 + $0x80] sm:$0xff]
        %v154 = vld [vmem:[%s116 + $0x88] sm:$0xff]
        %v155 = vld [vmem:[%s116 + $0x90] sm:$0xff]
        %v156 = vld [vmem:[%s116 + $0x98] sm:$0xff]
        %v157 = vld [vmem:[%s116 + $0xa0] sm:$0xff]
        %v158 = vld [vmem:[%s116 + $0xa8] sm:$0xff]
        %v159 = vld [vmem:[%s116 + $0xb0] sm:$0xff]
        %v160 = vld [vmem:[%s116 + $0xb8] sm:$0xff]
        %v161 = vld [vmem:[%s116 + $0xc0] sm:$0xff]
        %v162 = vld [vmem:[%s116 + $0xc8] sm:$0xff]
        %v163 = vld [vmem:[%s116 + $0xd0] sm:$0xff]
        %v164 = vld [vmem:[%s116 + $0xd8] sm:$0xff]
        %v165 = vld [vmem:[%s116 + $0xe0] sm:$0xff]
        %v166 = vld [vmem:[%s116 + $0xe8] sm:$0xff]
        %v167 = vld [vmem:[%s116 + $0xf0] sm:$0xff]
        %v168 = vld [vmem:[%s116 + $0xf8] sm:$0xff]
        %v169 = vld [vmem:[%s116 + $0x100] sm:$0xff]
        %v170 = vld [vmem:[%s116 + $0x108] sm:$0xff]
        %v171 = vld [vmem:[%s116 + $0x110] sm:$0xff]
        %v172 = vld [vmem:[%s116 + $0x118] sm:$0xff]
        %v173 = vld [vmem:[%s116 + $0x120] sm:$0xff]
        %v174 = vld [vmem:[%s116 + $0x128] sm:$0xff]
        %v175 = vld [vmem:[%s116 + $0x130] sm:$0xff]
        %v176 = vld [vmem:[%s116 + $0x138] sm:$0xff]
        %v177 = vld [vmem:[%s116 + $0x140] sm:$0xff]
        %v178 = vld [vmem:[%s116 + $0x148] sm:$0xff]
        %v179 = vld [vmem:[%s116 + $0x150] sm:$0xff]
        %v180 = vld [vmem:[%s116 + $0x158] sm:$0xff]
        %v181 = vld [vmem:[%s116 + $0x160] sm:$0xff]
        %v182 = vld [vmem:[%s116 + $0x168] sm:$0xff]
        %v183 = vld [vmem:[%s116 + $0x170] sm:$0xff]
        %v184 = vld [vmem:[%s116 + $0x178] sm:$0xff]
        %v185 = vld [vmem:[%s116 + $0x180] sm:$0xff]
        %v186 = vld [vmem:[%s116 + $0x188] sm:$0xff]
        %v187 = vld [vmem:[%s116 + $0x190] sm:$0xff]
        %v188 = vld [vmem:[%s116 + $0x198] sm:$0xff]
        %v189 = vld [vmem:[%s116 + $0x1a0] sm:$0xff]
        %v190 = vld [vmem:[%s116 + $0x1a8] sm:$0xff]
        %v191 = vld [vmem:[%s116 + $0x1b0] sm:$0xff]
        %v192 = vld [vmem:[%s116 + $0x1b8] sm:$0xff]
        %v193 = vld [vmem:[%s116 + $0x1c0] sm:$0xff]
        %v194 = vld [vmem:[%s116 + $0x1c8] sm:$0xff]
        %v195 = vld [vmem:[%s116 + $0x1d0] sm:$0xff]
        %v196 = vld [vmem:[%s116 + $0x1d8] sm:$0xff]
        %v197 = vld [vmem:[%s116 + $0x1e0] sm:$0xff]
        %v198 = vld [vmem:[%s116 + $0x1e8] sm:$0xff]
        %v199 = vld [vmem:[%s116 + $0x1f0] sm:$0xff]
        %v200 = vld [vmem:[%s116 + $0x1f8] sm:$0xff]
        %v201 = vld [vmem:[%s116 + $0x200] sm:$0xff]
        %v202 = vld [vmem:[%s116 + $0x208] sm:$0xff]
        %v203 = vld [vmem:[%s116 + $0x210] sm:$0xff]
        %v204 = vld [vmem:[%s116 + $0x218] sm:$0xff]
        %v205 = vld [vmem:[%s116 + $0x220] sm:$0xff]
        %v206 = vld [vmem:[%s116 + $0x228] sm:$0xff]
        %v207 = vld [vmem:[%s116 + $0x230] sm:$0xff]
        %v208 = vld [vmem:[%s116 + $0x238] sm:$0xff]
        %v209 = vld [vmem:[%s116 + $0x240] sm:$0xff]
        %v210 = vld [vmem:[%s116 + $0x248] sm:$0xff]
        %v211 = vld [vmem:[%s116 + $0x250] sm:$0xff]
        %v212 = vld [vmem:[%s116 + $0x258] sm:$0xff]
        %v213 = vld [vmem:[%s116 + $0x260] sm:$0xff]
        %v214 = vld [vmem:[%s116 + $0x268] sm:$0xff]
        %v215 = vld [vmem:[%s116 + $0x270] sm:$0xff]
        %v216 = vld [vmem:[%s116 + $0x278] sm:$0xff]
        %v217 = vld [vmem:[%s116 + $0x280] sm:$0xff]
        %v218 = vld [vmem:[%s116 + $0x288] sm:$0xff]
        %v219 = vld [vmem:[%s116 + $0x290] sm:$0xff]
        %v220 = vld [vmem:[%s116 + $0x298] sm:$0xff]
        %v221 = vld [vmem:[%s116 + $0x2a0] sm:$0xff]
        %v222 = vld [vmem:[%s116 + $0x2a8] sm:$0xff]
        %v223 = vld [vmem:[%s116 + $0x2b0] sm:$0xff]
        %v224 = vld [vmem:[%s116 + $0x2b8] sm:$0xff]
        %v225 = vld [vmem:[%s116 + $0x2c0] sm:$0xff]
        %v226 = vld [vmem:[%s116 + $0x2c8] sm:$0xff]
        %v227 = vld [vmem:[%s116 + $0x2d0] sm:$0xff]
        %v228 = vld [vmem:[%s116 + $0x2d8] sm:$0xff]
        %v229 = vld [vmem:[%s116 + $0x2e0] sm:$0xff]
        %v230 = vld [vmem:[%s116 + $0x2e8] sm:$0xff]
        %v231 = vld [vmem:[%s116 + $0x2f0] sm:$0xff]
        %v232 = vld [vmem:[%s116 + $0x2f8] sm:$0xff]
        %v233 = vld [vmem:[%s116 + $0x300] sm:$0xff]
        %v234 = vld [vmem:[%s116 + $0x308] sm:$0xff]
        %v235 = vld [vmem:[%s116 + $0x310] sm:$0xff]
        %v236 = vld [vmem:[%s116 + $0x318] sm:$0xff]
        %v237 = vld [vmem:[%s116 + $0x320] sm:$0xff]
        %v238 = vld [vmem:[%s116 + $0x328] sm:$0xff]
        %v239 = vld [vmem:[%s116 + $0x330] sm:$0xff]
        %v240 = vld [vmem:[%s116 + $0x338] sm:$0xff]
        %v241 = vld [vmem:[%s116 + $0x340] sm:$0xff]
        %v242 = vld [vmem:[%s116 + $0x348] sm:$0xff]
        %v243 = vld [vmem:[%s116 + $0x350] sm:$0xff]
        %v244 = vld [vmem:[%s116 + $0x358] sm:$0xff]
        %v245 = vld [vmem:[%s116 + $0x360] sm:$0xff]
        %v246 = vld [vmem:[%s116 + $0x368] sm:$0xff]
        %v247 = vld [vmem:[%s116 + $0x370] sm:$0xff]
        %v248 = vld [vmem:[%s116 + $0x378] sm:$0xff]
        %v249 = vld [vmem:[%s116 + $0x380] sm:$0xff]
        %v250 = vld [vmem:[%s116 + $0x388] sm:$0xff]
        %v251 = vld [vmem:[%s116 + $0x390] sm:$0xff]
        %v252 = vld [vmem:[%s116 + $0x398] sm:$0xff]
        %v253 = vld [vmem:[%s116 + $0x3a0] sm:$0xff]
        %v254 = vld [vmem:[%s116 + $0x3a8] sm:$0xff]
        %v255 = vld [vmem:[%s116 + $0x3b0] sm:$0xff]
        %v256 = vld [vmem:[%s116 + $0x3b8] sm:$0xff]
        %v257 = vld [vmem:[%s116 + $0x3c0] sm:$0xff]
        %v258 = vld [vmem:[%s116 + $0x3c8] sm:$0xff]
        %v259 = vld [vmem:[%s116 + $0x3d0] sm:$0xff]
        %v260 = vld [vmem:[%s116 + $0x3d8] sm:$0xff]
        %v261 = vld [vmem:[%s116 + $0x3e0] sm:$0xff]
        %v262 = vld [vmem:[%s116 + $0x3e8] sm:$0xff]
        %v263 = vld [vmem:[%s116 + $0x3f0] sm:$0xff]
        %v264 = vld [vmem:[%s116 + $0x3f8] sm:$0xff]
        %v265 = vmul.f32 %v137, 0.2
        %v266 = vmul.f32 %v138, 0.2
        %v267 = vmul.f32 %v139, 0.2
        %v268 = vmul.f32 %v140, 0.2
        %v269 = vmul.f32 %v141, 0.2
        %v270 = vmul.f32 %v142, 0.2
        %v271 = vmul.f32 %v143, 0.2
        %v272 = vmul.f32 %v144, 0.2
        %v273 = vmul.f32 %v145, 0.2
        %v274 = vmul.f32 %v146, 0.2
        %v275 = vmul.f32 %v147, 0.2
        %v276 = vmul.f32 %v148, 0.2
        %v277 = vmul.f32 %v149, 0.2
        %v278 = vmul.f32 %v150, 0.2
        %v279 = vmul.f32 %v151, 0.2
        %v280 = vmul.f32 %v152, 0.2
        %v281 = vmul.f32 %v153, 0.2
        %v282 = vmul.f32 %v154, 0.2
        %v283 = vmul.f32 %v155, 0.2
        %v284 = vmul.f32 %v156, 0.2
        %v285 = vmul.f32 %v157, 0.2
        %v286 = vmul.f32 %v158, 0.2
        %v287 = vmul.f32 %v159, 0.2
        %v288 = vmul.f32 %v160, 0.2
        %v289 = vmul.f32 %v161, 0.2
        %v290 = vmul.f32 %v162, 0.2
        %v291 = vmul.f32 %v163, 0.2
        %v292 = vmul.f32 %v164, 0.2
        %v293 = vmul.f32 %v165, 0.2
        %v294 = vmul.f32 %v166, 0.2
        %v295 = vmul.f32 %v167, 0.2
        %v296 = vmul.f32 %v168, 0.2
        %v297 = vmul.f32 %v169, 0.2
        %v298 = vmul.f32 %v170, 0.2
        %v299 = vmul.f32 %v171, 0.2
        %v300 = vmul.f32 %v172, 0.2
        %v301 = vmul.f32 %v173, 0.2
        %v302 = vmul.f32 %v174, 0.2
        %v303 = vmul.f32 %v175, 0.2
        %v304 = vmul.f32 %v176, 0.2
        %v305 = vmul.f32 %v177, 0.2
        %v306 = vmul.f32 %v178, 0.2
        %v307 = vmul.f32 %v179, 0.2
        %v308 = vmul.f32 %v180, 0.2
        %v309 = vmul.f32 %v181, 0.2
        %v310 = vmul.f32 %v182, 0.2
        %v311 = vmul.f32 %v183, 0.2
        %v312 = vmul.f32 %v184, 0.2
        %v313 = vmul.f32 %v185, 0.2
        %v314 = vmul.f32 %v186, 0.2
        %v315 = vmul.f32 %v187, 0.2
        %v316 = vmul.f32 %v188, 0.2
        %v317 = vmul.f32 %v189, 0.2
        %v318 = vmul.f32 %v190, 0.2
        %v319 = vmul.f32 %v191, 0.2
        %v320 = vmul.f32 %v192, 0.2
        %v321 = vmul.f32 %v193, 0.2
        %v322 = vmul.f32 %v194, 0.2
        %v323 = vmul.f32 %v195, 0.2
        %v324 = vmul.f32 %v196, 0.2
        %v325 = vmul.f32 %v197, 0.2
        %v326 = vmul.f32 %v198, 0.2
        %v327 = vmul.f32 %v199, 0.2
        %v328 = vmul.f32 %v200, 0.2
        %v329 = vmul.f32 %v201, 0.2
        %v330 = vmul.f32 %v202, 0.2
        %v331 = vmul.f32 %v203, 0.2
        %v332 = vmul.f32 %v204, 0.2
        %v333 = vmul.f32 %v205, 0.2
        %v334 = vmul.f32 %v206, 0.2
        %v335 = vmul.f32 %v207, 0.2
        %v336 = vmul.f32 %v208, 0.2
        %v337 = vmul.f32 %v209, 0.2
        %v338 = vmul.f32 %v210, 0.2
        %v339 = vmul.f32 %v211, 0.2
        %v340 = vmul.f32 %v212, 0.2
        %v341 = vmul.f32 %v213, 0.2
        %v342 = vmul.f32 %v214, 0.2
        %v343 = vmul.f32 %v215, 0.2
        %v344 = vmul.f32 %v216, 0.2
        %v345 = vmul.f32 %v217, 0.2
        %v346 = vmul.f32 %v218, 0.2
        %v347 = vmul.f32 %v219, 0.2
        %v348 = vmul.f32 %v220, 0.2
        %v349 = vmul.f32 %v221, 0.2
        %v350 = vmul.f32 %v222, 0.2
        %v351 = vmul.f32 %v223, 0.2
        %v352 = vmul.f32 %v224, 0.2
        %v353 = vmul.f32 %v225, 0.2
        %v354 = vmul.f32 %v226, 0.2
        %v355 = vmul.f32 %v227, 0.2
        %v356 = vmul.f32 %v228, 0.2
        %v357 = vmul.f32 %v229, 0.2
        %v358 = vmul.f32 %v230, 0.2
        %v359 = vmul.f32 %v231, 0.2
        %v360 = vmul.f32 %v232, 0.2
        %v361 = vmul.f32 %v233, 0.2
        %v362 = vmul.f32 %v234, 0.2
        %v363 = vmul.f32 %v235, 0.2
        %v364 = vmul.f32 %v236, 0.2
        %v365 = vmul.f32 %v237, 0.2
        %v366 = vmul.f32 %v238, 0.2
        %v367 = vmul.f32 %v239, 0.2
        %v368 = vmul.f32 %v240, 0.2
        %v369 = vmul.f32 %v241, 0.2
        %v370 = vmul.f32 %v242, 0.2
        %v371 = vmul.f32 %v243, 0.2
        %v372 = vmul.f32 %v244, 0.2
        %v373 = vmul.f32 %v245, 0.2
        %v374 = vmul.f32 %v246, 0.2
        %v375 = vmul.f32 %v247, 0.2
        %v376 = vmul.f32 %v248, 0.2
        %v377 = vmul.f32 %v249, 0.2
        %v378 = vmul.f32 %v250, 0.2
        %v379 = vmul.f32 %v251, 0.2
        %v380 = vmul.f32 %v252, 0.2
        %v381 = vmul.f32 %v253, 0.2
        %v382 = vmul.f32 %v254, 0.2
        %v383 = vmul.f32 %v255, 0.2
        %v384 = vmul.f32 %v256, 0.2
        %v385 = vmul.f32 %v257, 0.2
        %v386 = vmul.f32 %v258, 0.2
        %v387 = vmul.f32 %v259, 0.2
        %v388 = vmul.f32 %v260, 0.2
        %v389 = vmul.f32 %v261, 0.2
        %v390 = vmul.f32 %v262, 0.2
        %v391 = vmul.f32 %v263, 0.2
        %v392 = vmul.f32 %v264, 0.2
        %v393 = vmax.f32 %v265, %v137
        %v394 = vmax.f32 %v266, %v138
        %v395 = vmax.f32 %v267, %v139
        %v396 = vmax.f32 %v268, %v140
        %v397 = vmax.f32 %v269, %v141
        %v398 = vmax.f32 %v270, %v142
        %v399 = vmax.f32 %v271, %v143
        %v400 = vmax.f32 %v272, %v144
        %v401 = vmax.f32 %v273, %v145
        %v402 = vmax.f32 %v274, %v146
        %v403 = vmax.f32 %v275, %v147
        %v404 = vmax.f32 %v276, %v148
        %v405 = vmax.f32 %v277, %v149
        %v406 = vmax.f32 %v278, %v150
        %v407 = vmax.f32 %v279, %v151
        %v408 = vmax.f32 %v280, %v152
        %v409 = vmax.f32 %v281, %v153
        %v410 = vmax.f32 %v282, %v154
        %v411 = vmax.f32 %v283, %v155
        %v412 = vmax.f32 %v284, %v156
        %v413 = vmax.f32 %v285, %v157
        %v414 = vmax.f32 %v286, %v158
        %v415 = vmax.f32 %v287, %v159
        %v416 = vmax.f32 %v288, %v160
        %v417 = vmax.f32 %v289, %v161
        %v418 = vmax.f32 %v290, %v162
        %v419 = vmax.f32 %v291, %v163
        %v420 = vmax.f32 %v292, %v164
        %v421 = vmax.f32 %v293, %v165
        %v422 = vmax.f32 %v294, %v166
        %v423 = vmax.f32 %v295, %v167
        %v424 = vmax.f32 %v296, %v168
        %v425 = vmax.f32 %v297, %v169
        %v426 = vmax.f32 %v298, %v170
        %v427 = vmax.f32 %v299, %v171
        %v428 = vmax.f32 %v300, %v172
        %v429 = vmax.f32 %v301, %v173
        %v430 = vmax.f32 %v302, %v174
        %v431 = vmax.f32 %v303, %v175
        %v432 = vmax.f32 %v304, %v176
        %v433 = vmax.f32 %v305, %v177
        %v434 = vmax.f32 %v306, %v178
        %v435 = vmax.f32 %v307, %v179
        %v436 = vmax.f32 %v308, %v180
        %v437 = vmax.f32 %v309, %v181
        %v438 = vmax.f32 %v310, %v182
        %v439 = vmax.f32 %v311, %v183
        %v440 = vmax.f32 %v312, %v184
        %v441 = vmax.f32 %v313, %v185
        %v442 = vmax.f32 %v314, %v186
        %v443 = vmax.f32 %v315, %v187
        %v444 = vmax.f32 %v316, %v188
        %v445 = vmax.f32 %v317, %v189
        %v446 = vmax.f32 %v318, %v190
        %v447 = vmax.f32 %v319, %v191
        %v448 = vmax.f32 %v320, %v192
        %v449 = vmax.f32 %v321, %v193
        %v450 = vmax.f32 %v322, %v194
        %v451 = vmax.f32 %v323, %v195
        %v452 = vmax.f32 %v324, %v196
        %v453 = vmax.f32 %v325, %v197
        %v454 = vmax.f32 %v326, %v198
        %v455 = vmax.f32 %v327, %v199
        %v456 = vmax.f32 %v328, %v200
        %v457 = vmax.f32 %v329, %v201
        %v458 = vmax.f32 %v330, %v202
        %v459 = vmax.f32 %v331, %v203
        %v460 = vmax.f32 %v332, %v204
        %v461 = vmax.f32 %v333, %v205
        %v462 = vmax.f32 %v334, %v206
        %v463 = vmax.f32 %v335, %v207
        %v464 = vmax.f32 %v336, %v208
        %v465 = vmax.f32 %v337, %v209
        %v466 = vmax.f32 %v338, %v210
        %v467 = vmax.f32 %v339, %v211
        %v468 = vmax.f32 %v340, %v212
        %v469 = vmax.f32 %v341, %v213
        %v470 = vmax.f32 %v342, %v214
        %v471 = vmax.f32 %v343, %v215
        %v472 = vmax.f32 %v344, %v216
        %v473 = vmax.f32 %v345, %v217
        %v474 = vmax.f32 %v346, %v218
        %v475 = vmax.f32 %v347, %v219
        %v476 = vmax.f32 %v348, %v220
        %v477 = vmax.f32 %v349, %v221
        %v478 = vmax.f32 %v350, %v222
        %v479 = vmax.f32 %v351, %v223
        %v480 = vmax.f32 %v352, %v224
        %v481 = vmax.f32 %v353, %v225
        %v482 = vmax.f32 %v354, %v226
        %v483 = vmax.f32 %v355, %v227
        %v484 = vmax.f32 %v356, %v228
        %v485 = vmax.f32 %v357, %v229
        %v486 = vmax.f32 %v358, %v230
        %v487 = vmax.f32 %v359, %v231
        %v488 = vmax.f32 %v360, %v232
        %v489 = vmax.f32 %v361, %v233
        %v490 = vmax.f32 %v362, %v234
        %v491 = vmax.f32 %v363, %v235
        %v492 = vmax.f32 %v364, %v236
        %v493 = vmax.f32 %v365, %v237
        %v494 = vmax.f32 %v366, %v238
        %v495 = vmax.f32 %v367, %v239
        %v496 = vmax.f32 %v368, %v240
        %v497 = vmax.f32 %v369, %v241
        %v498 = vmax.f32 %v370, %v242
        %v499 = vmax.f32 %v371, %v243
        %v500 = vmax.f32 %v372, %v244
        %v501 = vmax.f32 %v373, %v245
        %v502 = vmax.f32 %v374, %v246
        %v503 = vmax.f32 %v375, %v247
        %v504 = vmax.f32 %v376, %v248
        %v505 = vmax.f32 %v377, %v249
        %v506 = vmax.f32 %v378, %v250
        %v507 = vmax.f32 %v379, %v251
        %v508 = vmax.f32 %v380, %v252
        %v509 = vmax.f32 %v381, %v253
        %v510 = vmax.f32 %v382, %v254
        %v511 = vmax.f32 %v383, %v255
        %v512 = vmax.f32 %v384, %v256
        %v513 = vmax.f32 %v385, %v257
        %v514 = vmax.f32 %v386, %v258
        %v515 = vmax.f32 %v387, %v259
        %v516 = vmax.f32 %v388, %v260
        %v517 = vmax.f32 %v389, %v261
        %v518 = vmax.f32 %v390, %v262
        %v519 = vmax.f32 %v391, %v263
        %v520 = vmax.f32 %v392, %v264
        %521 = vst [vmem:[%s134] sm:$0xff] %v393
        %522 = vst [vmem:[%s134 + $0x8] sm:$0xff] %v394
        %523 = vst [vmem:[%s134 + $0x10] sm:$0xff] %v395
        %524 = vst [vmem:[%s134 + $0x18] sm:$0xff] %v396
        %525 = vst [vmem:[%s134 + $0x20] sm:$0xff] %v397
        %526 = vst [vmem:[%s134 + $0x28] sm:$0xff] %v398
        %527 = vst [vmem:[%s134 + $0x30] sm:$0xff] %v399
        %528 = vst [vmem:[%s134 + $0x38] sm:$0xff] %v400
        %529 = vst [vmem:[%s134 + $0x40] sm:$0xff] %v401
        %530 = vst [vmem:[%s134 + $0x48] sm:$0xff] %v402
        %531 = vst [vmem:[%s134 + $0x50] sm:$0xff] %v403
        %532 = vst [vmem:[%s134 + $0x58] sm:$0xff] %v404
        %533 = vst [vmem:[%s134 + $0x60] sm:$0xff] %v405
        %534 = vst [vmem:[%s134 + $0x68] sm:$0xff] %v406
        %535 = vst [vmem:[%s134 + $0x70] sm:$0xff] %v407
        %536 = vst [vmem:[%s134 + $0x78] sm:$0xff] %v408
        %537 = vst [vmem:[%s134 + $0x80] sm:$0xff] %v409
        %538 = vst [vmem:[%s134 + $0x88] sm:$0xff] %v410
        %539 = vst [vmem:[%s134 + $0x90] sm:$0xff] %v411
        %540 = vst [vmem:[%s134 + $0x98] sm:$0xff] %v412
        %541 = vst [vmem:[%s134 + $0xa0] sm:$0xff] %v413
        %542 = vst [vmem:[%s134 + $0xa8] sm:$0xff] %v414
        %543 = vst [vmem:[%s134 + $0xb0] sm:$0xff] %v415
        %544 = vst [vmem:[%s134 + $0xb8] sm:$0xff] %v416
        %545 = vst [vmem:[%s134 + $0xc0] sm:$0xff] %v417
        %546 = vst [vmem:[%s134 + $0xc8] sm:$0xff] %v418
        %547 = vst [vmem:[%s134 + $0xd0] sm:$0xff] %v419
        %548 = vst [vmem:[%s134 + $0xd8] sm:$0xff] %v420
        %549 = vst [vmem:[%s134 + $0xe0] sm:$0xff] %v421
        %550 = vst [vmem:[%s134 + $0xe8] sm:$0xff] %v422
        %551 = vst [vmem:[%s134 + $0xf0] sm:$0xff] %v423
        %552 = vst [vmem:[%s134 + $0xf8] sm:$0xff] %v424
        %553 = vst [vmem:[%s134 + $0x100] sm:$0xff] %v425
        %554 = vst [vmem:[%s134 + $0x108] sm:$0xff] %v426
        %555 = vst [vmem:[%s134 + $0x110] sm:$0xff] %v427
        %556 = vst [vmem:[%s134 + $0x118] sm:$0xff] %v428
        %557 = vst [vmem:[%s134 + $0x120] sm:$0xff] %v429
        %558 = vst [vmem:[%s134 + $0x128] sm:$0xff] %v430
        %559 = vst [vmem:[%s134 + $0x130] sm:$0xff] %v431
        %560 = vst [vmem:[%s134 + $0x138] sm:$0xff] %v432
        %561 = vst [vmem:[%s134 + $0x140] sm:$0xff] %v433
        %562 = vst [vmem:[%s134 + $0x148] sm:$0xff] %v434
        %563 = vst [vmem:[%s134 + $0x150] sm:$0xff] %v435
        %564 = vst [vmem:[%s134 + $0x158] sm:$0xff] %v436
        %565 = vst [vmem:[%s134 + $0x160] sm:$0xff] %v437
        %566 = vst [vmem:[%s134 + $0x168] sm:$0xff] %v438
        %567 = vst [vmem:[%s134 + $0x170] sm:$0xff] %v439
        %568 = vst [vmem:[%s134 + $0x178] sm:$0xff] %v440
        %569 = vst [vmem:[%s134 + $0x180] sm:$0xff] %v441
        %570 = vst [vmem:[%s134 + $0x188] sm:$0xff] %v442
        %571 = vst [vmem:[%s134 + $0x190] sm:$0xff] %v443
        %572 = vst [vmem:[%s134 + $0x198] sm:$0xff] %v444
        %573 = vst [vmem:[%s134 + $0x1a0] sm:$0xff] %v445
        %574 = vst [vmem:[%s134 + $0x1a8] sm:$0xff] %v446
        %575 = vst [vmem:[%s134 + $0x1b0] sm:$0xff] %v447
        %576 = vst [vmem:[%s134 + $0x1b8] sm:$0xff] %v448
        %577 = vst [vmem:[%s134 + $0x1c0] sm:$0xff] %v449
        %578 = vst [vmem:[%s134 + $0x1c8] sm:$0xff] %v450
        %579 = vst [vmem:[%s134 + $0x1d0] sm:$0xff] %v451
        %580 = vst [vmem:[%s134 + $0x1d8] sm:$0xff] %v452
        %581 = vst [vmem:[%s134 + $0x1e0] sm:$0xff] %v453
        %582 = vst [vmem:[%s134 + $0x1e8] sm:$0xff] %v454
        %583 = vst [vmem:[%s134 + $0x1f0] sm:$0xff] %v455
        %584 = vst [vmem:[%s134 + $0x1f8] sm:$0xff] %v456
        %585 = vst [vmem:[%s134 + $0x200] sm:$0xff] %v457
        %586 = vst [vmem:[%s134 + $0x208] sm:$0xff] %v458
        %587 = vst [vmem:[%s134 + $0x210] sm:$0xff] %v459
        %588 = vst [vmem:[%s134 + $0x218] sm:$0xff] %v460
        %589 = vst [vmem:[%s134 + $0x220] sm:$0xff] %v461
        %590 = vst [vmem:[%s134 + $0x228] sm:$0xff] %v462
        %591 = vst [vmem:[%s134 + $0x230] sm:$0xff] %v463
        %592 = vst [vmem:[%s134 + $0x238] sm:$0xff] %v464
        %593 = vst [vmem:[%s134 + $0x240] sm:$0xff] %v465
        %594 = vst [vmem:[%s134 + $0x248] sm:$0xff] %v466
        %595 = vst [vmem:[%s134 + $0x250] sm:$0xff] %v467
        %596 = vst [vmem:[%s134 + $0x258] sm:$0xff] %v468
        %597 = vst [vmem:[%s134 + $0x260] sm:$0xff] %v469
        %598 = vst [vmem:[%s134 + $0x268] sm:$0xff] %v470
        %599 = vst [vmem:[%s134 + $0x270] sm:$0xff] %v471
        %600 = vst [vmem:[%s134 + $0x278] sm:$0xff] %v472
        %601 = vst [vmem:[%s134 + $0x280] sm:$0xff] %v473
        %602 = vst [vmem:[%s134 + $0x288] sm:$0xff] %v474
        %603 = vst [vmem:[%s134 + $0x290] sm:$0xff] %v475
        %604 = vst [vmem:[%s134 + $0x298] sm:$0xff] %v476
        %605 = vst [vmem:[%s134 + $0x2a0] sm:$0xff] %v477
        %606 = vst [vmem:[%s134 + $0x2a8] sm:$0xff] %v478
        %607 = vst [vmem:[%s134 + $0x2b0] sm:$0xff] %v479
        %608 = vst [vmem:[%s134 + $0x2b8] sm:$0xff] %v480
        %609 = vst [vmem:[%s134 + $0x2c0] sm:$0xff] %v481
        %610 = vst [vmem:[%s134 + $0x2c8] sm:$0xff] %v482
        %611 = vst [vmem:[%s134 + $0x2d0] sm:$0xff] %v483
        %612 = vst [vmem:[%s134 + $0x2d8] sm:$0xff] %v484
        %613 = vst [vmem:[%s134 + $0x2e0] sm:$0xff] %v485
        %614 = vst [vmem:[%s134 + $0x2e8] sm:$0xff] %v486
        %615 = vst [vmem:[%s134 + $0x2f0] sm:$0xff] %v487
        %616 = vst [vmem:[%s134 + $0x2f8] sm:$0xff] %v488
        %617 = vst [vmem:[%s134 + $0x300] sm:$0xff] %v489
        %618 = vst [vmem:[%s134 + $0x308] sm:$0xff] %v490
        %619 = vst [vmem:[%s134 + $0x310] sm:$0xff] %v491
        %620 = vst [vmem:[%s134 + $0x318] sm:$0xff] %v492
        %621 = vst [vmem:[%s134 + $0x320] sm:$0xff] %v493
        %622 = vst [vmem:[%s134 + $0x328] sm:$0xff] %v494
        %623 = vst [vmem:[%s134 + $0x330] sm:$0xff] %v495
        %624 = vst [vmem:[%s134 + $0x338] sm:$0xff] %v496
        %625 = vst [vmem:[%s134 + $0x340] sm:$0xff] %v497
        %626 = vst [vmem:[%s134 + $0x348] sm:$0xff] %v498
        %627 = vst [vmem:[%s134 + $0x350] sm:$0xff] %v499
        %628 = vst [vmem:[%s134 + $0x358] sm:$0xff] %v500
        %629 = vst [vmem:[%s134 + $0x360] sm:$0xff] %v501
        %630 = vst [vmem:[%s134 + $0x368] sm:$0xff] %v502
        %631 = vst [vmem:[%s134 + $0x370] sm:$0xff] %v503
        %632 = vst [vmem:[%s134 + $0x378] sm:$0xff] %v504
        %633 = vst [vmem:[%s134 + $0x380] sm:$0xff] %v505
        %634 = vst [vmem:[%s134 + $0x388] sm:$0xff] %v506
        %635 = vst [vmem:[%s134 + $0x390] sm:$0xff] %v507
        %636 = vst [vmem:[%s134 + $0x398] sm:$0xff] %v508
        %637 = vst [vmem:[%s134 + $0x3a0] sm:$0xff] %v509
        %638 = vst [vmem:[%s134 + $0x3a8] sm:$0xff] %v510
        %639 = vst [vmem:[%s134 + $0x3b0] sm:$0xff] %v511
        %640 = vst [vmem:[%s134 + $0x3b8] sm:$0xff] %v512
        %641 = vst [vmem:[%s134 + $0x3c0] sm:$0xff] %v513
        %642 = vst [vmem:[%s134 + $0x3c8] sm:$0xff] %v514
        %643 = vst [vmem:[%s134 + $0x3d0] sm:$0xff] %v515
        %644 = vst [vmem:[%s134 + $0x3d8] sm:$0xff] %v516
        %645 = vst [vmem:[%s134 + $0x3e0] sm:$0xff] %v517
        %646 = vst [vmem:[%s134 + $0x3e8] sm:$0xff] %v518
        %647 = vst [vmem:[%s134 + $0x3f0] sm:$0xff] %v519
        %648 = vst [vmem:[%s134 + $0x3f8] sm:$0xff] %v520
        %s649 = sand.u32 %s52, 1
        %s650 = scalar_lea.sflag [#allocation4], %s649
        %s651 = sand.u32 %s52, 1
        %s652 = smul.addr %s651, 1024
        %s653 = scalar_lea.vmem [#allocation5], %s652
        // Predicated region
        $region29: #{tpu_custom_call.1} parent=23 // pred_check
          %p654 = pneg %p62
        $region30: #{tpu_custom_call.1} parent=23 // pred_check_branch
          %656 = sbr.rel (%p654) target = $region32
        $region31: #{tpu_custom_call.1} parent=23 // pred_region
          %s657 = smul.u32 128, %s18
          %s659 = ssub.s32 16384, 16384
          %660 = vsyncadd %s650, %s659
          %s661 = smul.addr %s657, 128
          %s662 = scalar_lea.hbm %s1, %s661
          %s663 = sshll.u32 %s653, 4
          %s664 = int_to_ptr.vmem [resolvable:$true] %s663
          %669 = dma.vmem_to_hbm [thread:$0]  %s664, 16384, %s662, %s650, 128, 128, 8
        $region32: #{tpu_custom_call.1} parent=23 // pred_fallthru
          _
      $region24: #{tpu_custom_call.1} parent=5 // pred_fallthru
        _
      %p670 = scmp.le.s32.totalorder 2, %s13
      // Predicated region
      $region33: #{tpu_custom_call.1} parent=5 // pred_check
        %p671 = pneg %p670
      $region34: #{tpu_custom_call.1} parent=5 // pred_check_branch
        %673 = sbr.rel (%p671) target = $region36
      $region35: #{tpu_custom_call.1} parent=5 // pred_region
        %s674 = ssub.s32 %s13, 2
        // Predicated region
        $region37: #{tpu_custom_call.1} parent=35 // pred_check
          %p675 = pneg %p68
        $region38: #{tpu_custom_call.1} parent=35 // pred_check_branch
          %677 = sbr.rel (%p675) target = $region40
        $region39: #{tpu_custom_call.1} parent=35 // pred_region
          %s678 = sand.u32 %s53, 1
          %s679 = scalar_lea.sflag [#allocation4], %s678
          %s680 = sand.u32 %s53, 1
          %s681 = smul.addr %s680, 1024
          %s682 = scalar_lea.vmem [#allocation5], %s681
          %683 = dma.done %s679, 16384
        $region40: #{tpu_custom_call.1} parent=35 // pred_fallthru
          _
      $region36: #{tpu_custom_call.1} parent=5 // pred_fallthru
        _
    $region6: #{tpu_custom_call.1} parent=1 // loop_footer
      %s17 = sadd.s32 1, %s13
    $region7: #{tpu_custom_call.1} parent=1 // loop_footer_branch
      %12 = sbr.rel target = $region3
    $region8: #{tpu_custom_call.1} parent=1 // loop_exit
      _
    %684 = vsyncpa [#allocation3], 1
    %s685 = scalar_lea.sflag [#allocation3], 1
    %686 = vsyncpa %s685, 1
    %687 = vsyncpa [#allocation4], 1
    %s688 = scalar_lea.sflag [#allocation4], 1
    %689 = vsyncpa %s688, 1

</llo_original>
